<compile_context>
chip_gen: v7x
topology: tpu7x:2x2x1
jax: 0.10.0
libtpu: 0.0.40
codegen_flags: <defaults>
</compile_context>

<pallas_src>
import jax
import jax.numpy as jnp
from jax.experimental import pallas as pl
from jax.experimental.pallas import tpu as pltpu


def autoencoder_kernel(x_ref, w1_ref, b1_ref, w2_ref, b2_ref, out_ref):
    # x_ref : (TB, in_dim)  f32      w1_ref: (in_dim, hid) bf16   b1_ref: (1, hid)    f32
    # w2_ref: (hid, in_dim) bf16     b2_ref: (1, in_dim)   f32    out_ref:(TB, in_dim)
    # In-kernel bf16 cast: a VPU op fully hidden under DMA/MXU, no wrapper-side pass.
    x = x_ref[...].astype(jnp.bfloat16)

    # lin1 + ReLU: bf16 x bf16 -> f32 accumulation on the MXU; bias/ReLU in f32 (VPU).
    y1 = jnp.dot(x, w1_ref[...], preferred_element_type=jnp.float32) + b1_ref[...]
    y2 = jnp.maximum(y1, 0.0)

    # lin2: feed the ReLU output back as bf16 (full MXU bf16 rate), accumulate in f32.
    y3 = jnp.dot(y2.astype(jnp.bfloat16), w2_ref[...],
                 preferred_element_type=jnp.float32) + b2_ref[...]

    # sigmoid(x) = 0.5 * (tanh(x / 2) + 1): a single EUP transcendental per element.
    out_ref[...] = (0.5 * (jnp.tanh(0.5 * y3) + 1.0)).astype(out_ref.dtype)


def autoencoder_forward(x, w1, b1, w2, b2, *, tb=None, out_dtype=jnp.float32):
    """Fused autoencoder forward.

    x : (B, in_dim) f32 activations.
    w1: (in_dim, hid), w2: (hid, in_dim) -- pre-transposed vs nn.Linear and ideally
    stored persistently in bf16.  b1: (1, hid), b2: (1, in_dim) f32.
    Returns (B, in_dim) in `out_dtype` (f32 by default to match the PyTorch module).
    """
    B, in_dim = x.shape
    hid = w1.shape[1]

    # Batch tile: the biggest that comfortably fits VMEM wins (per-step overhead and
    # weight re-push dominate at small tiles).  Small batches run as a single tile.
    if tb is None:
        tb = B if B <= 512 else 512   # sweep per model shape / chip generation
    tb = min(tb, B)
    n_tiles = pl.cdiv(B, tb)          # ragged final block is write-masked; no pad/slice

    # Constant-index weight/bias blocks: loaded once, VMEM-resident across all batch
    # tiles, and single-buffered so they don't burn a second VMEM copy.
    def resident(shape):
        return pl.BlockSpec(shape, lambda i: (0, 0), pipeline_mode=pl.Buffered(1))

    return pl.pallas_call(
        autoencoder_kernel,
        out_shape=jax.ShapeDtypeStruct((B, in_dim), out_dtype),
        grid_spec=pltpu.PrefetchScalarGridSpec(
            num_scalar_prefetch=0,
            grid=(n_tiles,),
            in_specs=[
                # Activations: tiled over the batch grid axis, pipelined DMA.
                pl.BlockSpec((tb, in_dim), lambda i: (i, 0)),
                resident((in_dim, hid)),
                resident((1, hid)),
                resident((hid, in_dim)),
                resident((1, in_dim)),
            ],
            out_specs=pl.BlockSpec((tb, in_dim), lambda i: (i, 0)),
        ),
        compiler_params=pltpu.CompilerParams(
            # Independent batch tiles.  On v7x with n_tiles >= 4, consider
            # pltpu.CORE_PARALLEL for explicit cross-TensorCore sharding.
            dimension_semantics=("parallel",),
            # Above the 16/32 MiB scoped defaults, under v7x's 64 MiB physical VMEM.
            vmem_limit_bytes=48 * 1024 * 1024,
        ),
    )(x, w1, b1, w2, b2)


def reference_forward(x, w1, b1, w2, b2):
    y1 = x @ w1 + b1
    y2 = jnp.maximum(y1, 0.0)
    y3 = y2 @ w2 + b2
    return jax.nn.sigmoid(y3)


if __name__ == "__main__":
    # MNIST-autoencoder-like shapes, small but tile/MXU aligned: one 256-row batch tile,
    # in_dim=256, hid=128.
    B, in_dim, hid = 256, 256, 128

    key = jax.random.PRNGKey(0)
    kx, kw1, kb1, kw2, kb2 = jax.random.split(key, 5)

    x = jax.random.uniform(kx, (B, in_dim), dtype=jnp.float32)

    # nn.Linear-style U(-1/sqrt(fan_in), 1/sqrt(fan_in)) init.  Weights stored
    # pre-transposed: w1 is (in_dim, hid), w2 is (hid, in_dim).
    bound1 = 1.0 / jnp.sqrt(in_dim)
    bound2 = 1.0 / jnp.sqrt(hid)
    w1 = jax.random.uniform(kw1, (in_dim, hid), minval=-bound1, maxval=bound1,
                            dtype=jnp.float32)
    b1 = jax.random.uniform(kb1, (1, hid), minval=-bound1, maxval=bound1,
                            dtype=jnp.float32)
    w2 = jax.random.uniform(kw2, (hid, in_dim), minval=-bound2, maxval=bound2,
                            dtype=jnp.float32)
    b2 = jax.random.uniform(kb2, (1, in_dim), minval=-bound2, maxval=bound2,
                            dtype=jnp.float32)

    # Persistent bf16 weight storage: converted once at "init", not per forward call.
    w1_bf = w1.astype(jnp.bfloat16)
    w2_bf = w2.astype(jnp.bfloat16)

    out = autoencoder_forward(x, w1_bf, b1, w2_bf, b2)
    jax.block_until_ready(out)

    ref = reference_forward(x, w1, b1, w2, b2)
    assert out.shape == (B, in_dim)
    # bf16 matmul operands (f32 accumulation) -> loosened tolerance vs the f32 reference.
    assert jnp.allclose(out, ref, atol=2e-2, rtol=2e-2), "mismatch vs reference"

    print("KERNEL_OK")
</pallas_src>

<mosaic_0001>
module attributes {stable_mosaic.version = 11 : i64} {
  func.func @autoencoder_kernel(%arg0: i32, %arg1: memref<256x256xf32, #tpu.memory_space<vmem>>, %arg2: memref<256x128xbf16, #tpu.memory_space<vmem>>, %arg3: memref<1x128xf32, #tpu.memory_space<vmem>>, %arg4: memref<128x256xbf16, #tpu.memory_space<vmem>>, %arg5: memref<1x256xf32, #tpu.memory_space<vmem>>, %arg6: memref<256x256xf32, #tpu.memory_space<vmem>>) attributes {dimension_semantics = [#tpu.dimension_semantics<parallel>], iteration_bounds = array<i64: 1>, scalar_prefetch = 0 : i64, scratch_operands = 0 : i64, tpu.core_type = #tpu.core_type<tc>, window_params = [{transform_indices = @transform_0, window_bounds = array<i64: 256, 256>}, {pipeline_mode = #tpu.pipeline_mode<synchronous>, transform_indices = @transform_1, window_bounds = array<i64: 256, 128>}, {pipeline_mode = #tpu.pipeline_mode<synchronous>, transform_indices = @transform_2, window_bounds = array<i64: 1, 128>}, {pipeline_mode = #tpu.pipeline_mode<synchronous>, transform_indices = @transform_3, window_bounds = array<i64: 128, 256>}, {pipeline_mode = #tpu.pipeline_mode<synchronous>, transform_indices = @transform_4, window_bounds = array<i64: 1, 256>}, {transform_indices = @transform_5, window_bounds = array<i64: 256, 256>}]} {
    %c0 = arith.constant 0 : index
    %c0_0 = arith.constant 0 : index
    %0 = vector.load %arg1[%c0, %c0_0] : memref<256x256xf32, #tpu.memory_space<vmem>>, vector<256x256xf32>
    %1 = arith.truncf %0 : vector<256x256xf32> to vector<256x256xbf16>
    %c0_1 = arith.constant 0 : index
    %c0_2 = arith.constant 0 : index
    %2 = vector.load %arg2[%c0_1, %c0_2] : memref<256x128xbf16, #tpu.memory_space<vmem>>, vector<256x128xbf16>
    %cst = arith.constant dense<0.000000e+00> : vector<256x128xf32>
    %3 = tpu.matmul %1, %2, %cst {dimension_numbers = #tpu.dot_dimension_numbers<[1], [0], [0], [1], [0, 0, 1, 1], [], []>} : vector<256x256xbf16>, vector<256x128xbf16>, vector<256x128xf32> -> vector<256x128xf32>
    %c0_3 = arith.constant 0 : index
    %c0_4 = arith.constant 0 : index
    %4 = vector.load %arg3[%c0_3, %c0_4] : memref<1x128xf32, #tpu.memory_space<vmem>>, vector<1x128xf32>
    %5 = vector.broadcast %4 : vector<1x128xf32> to vector<256x128xf32>
    %6 = arith.addf %3, %5 : vector<256x128xf32>
    %cst_5 = arith.constant 0.000000e+00 : f32
    %7 = vector.broadcast %cst_5 : f32 to vector<256x128xf32>
    %8 = arith.maximumf %6, %7 : vector<256x128xf32>
    %9 = arith.truncf %8 : vector<256x128xf32> to vector<256x128xbf16>
    %c0_6 = arith.constant 0 : index
    %c0_7 = arith.constant 0 : index
    %10 = vector.load %arg4[%c0_6, %c0_7] : memref<128x256xbf16, #tpu.memory_space<vmem>>, vector<128x256xbf16>
    %cst_8 = arith.constant dense<0.000000e+00> : vector<256x256xf32>
    %11 = tpu.matmul %9, %10, %cst_8 {dimension_numbers = #tpu.dot_dimension_numbers<[1], [0], [0], [1], [0, 0, 1, 1], [], []>} : vector<256x128xbf16>, vector<128x256xbf16>, vector<256x256xf32> -> vector<256x256xf32>
    %c0_9 = arith.constant 0 : index
    %c0_10 = arith.constant 0 : index
    %12 = vector.load %arg5[%c0_9, %c0_10] : memref<1x256xf32, #tpu.memory_space<vmem>>, vector<1x256xf32>
    %13 = vector.broadcast %12 : vector<1x256xf32> to vector<256x256xf32>
    %14 = arith.addf %11, %13 : vector<256x256xf32>
    %cst_11 = arith.constant 5.000000e-01 : f32
    %15 = vector.broadcast %cst_11 : f32 to vector<256x256xf32>
    %16 = arith.mulf %15, %14 : vector<256x256xf32>
    %17 = math.tanh %16 : vector<256x256xf32>
    %cst_12 = arith.constant 1.000000e+00 : f32
    %18 = vector.broadcast %cst_12 : f32 to vector<256x256xf32>
    %19 = arith.addf %17, %18 : vector<256x256xf32>
    %cst_13 = arith.constant 5.000000e-01 : f32
    %20 = vector.broadcast %cst_13 : f32 to vector<256x256xf32>
    %21 = arith.mulf %20, %19 : vector<256x256xf32>
    %c0_14 = arith.constant 0 : index
    %c0_15 = arith.constant 0 : index
    %22 = vector.load %arg6[%c0_14, %c0_15] : memref<256x256xf32, #tpu.memory_space<vmem>>, vector<256x256xf32>
    tpu.vector_store %arg6[%c0_14, %c0_15], %21 {strides = array<i32>} : memref<256x256xf32, #tpu.memory_space<vmem>>, vector<256x256xf32>,
    return
  }
  func.func @transform_0(%arg0: i32) -> (i32, i32) {
    %c0_i32 = arith.constant 0 : i32
    %c0_i32_0 = arith.constant 0 : i32
    return %arg0, %c0_i32 : i32, i32
  }
  func.func @transform_1(%arg0: i32) -> (i32, i32) {
    %c0_i32 = arith.constant 0 : i32
    %c0_i32_0 = arith.constant 0 : i32
    %c0_i32_1 = arith.constant 0 : i32
    return %c0_i32, %c0_i32_0 : i32, i32
  }
  func.func @transform_2(%arg0: i32) -> (i32, i32) {
    %c0_i32 = arith.constant 0 : i32
    %c0_i32_0 = arith.constant 0 : i32
    %c0_i32_1 = arith.constant 0 : i32
    return %c0_i32, %c0_i32_0 : i32, i32
  }
  func.func @transform_3(%arg0: i32) -> (i32, i32) {
    %c0_i32 = arith.constant 0 : i32
    %c0_i32_0 = arith.constant 0 : i32
    %c0_i32_1 = arith.constant 0 : i32
    return %c0_i32, %c0_i32_0 : i32, i32
  }
  func.func @transform_4(%arg0: i32) -> (i32, i32) {
    %c0_i32 = arith.constant 0 : i32
    %c0_i32_0 = arith.constant 0 : i32
    %c0_i32_1 = arith.constant 0 : i32
    return %c0_i32, %c0_i32_0 : i32, i32
  }
  func.func @transform_5(%arg0: i32) -> (i32, i32) {
    %c0_i32 = arith.constant 0 : i32
    %c0_i32_0 = arith.constant 0 : i32
    return %arg0, %c0_i32 : i32, i32
  }
}

</mosaic_0001>

<llo_original>
// kernel: tpu_custom_call.1
$region0: #{tpu_custom_call.1}
  #allocation0 [shape = 'u32[]', space=smem, size = 0x4, offset = 0x4, fixed_abs, tag = 'smem constant byte address 0x4 - core index']
  #allocation1 [shape = 'u32[144,128]{1,0:T(1,128)}', space=vmem, size = 0x12000, scoped, tag = 'internal scratch']
  %s0 = inlined_call_operand.hbm [shape: f32[256,256], index: 0, kind: input, shape index: {}]
  %s1 = inlined_call_operand.hbm [shape: bf16[256,128], index: 1, kind: input, shape index: {}]
  %s2 = inlined_call_operand.vmem [shape: f32[1,128], index: 2, kind: input, shape index: {}]
  %s3 = inlined_call_operand.hbm [shape: bf16[128,256], index: 3, kind: input, shape index: {}]
  %s4 = inlined_call_operand.vmem [shape: f32[1,256], index: 4, kind: input, shape index: {}]
  %s5 = inlined_call_operand.hbm [shape: f32[256,256], index: 5, kind: output, shape index: {}]
  %s6 = sld [smem:[#allocation0]]
  $region42: #{tpu_custom_call.1} parent=0
    _
  %s8 = ssub.s32 1, %s6
  %s9 = scalar_select 0, %s8, %s6
  $region1: #{tpu_custom_call.1} parent=0
    #allocation2 [shape = 'u8[262144]{0}', space=vmem, size = 0x40000, scoped, tag = 'input window, operand 0, single buffered']
    #allocation3 [shape = 's32[1]{0}', space=sflag, size = 0x4, scoped, tag = 'scoped memory for tpu_custom_call.1']
    #allocation4 [shape = 's32[1]{0}', space=sflag, size = 0x4, scoped, tag = 'scoped memory for tpu_custom_call.1']
    #allocation5 [shape = 'u8[65536]{0}', space=vmem, size = 0x10000, scoped, tag = 'input window, operand 1, single buffered']
    #allocation6 [shape = 's32[1]{0}', space=sflag, size = 0x4, scoped, tag = 'scoped memory for tpu_custom_call.1']
    #allocation7 [shape = 'u8[65536]{0}', space=vmem, size = 0x10000, scoped, tag = 'input window, operand 3, single buffered']
    #allocation8 [shape = 'u8[262144]{0}', space=vmem, size = 0x40000, scoped, tag = 'output window, operand 0, single buffered']
    %10 = vsyncpa [#allocation3], 0
    %11 = vsyncpa [#allocation6], 0
    %12 = vsyncpa [#allocation4], 0
    // Predicated region
    $region2: #{tpu_custom_call.1} parent=1 // pred_check
      _
    $region3: #{tpu_custom_call.1} parent=1 // pred_check_branch
      %14 = sbr.rel (0) target = $region5
    $region4: #{tpu_custom_call.1} parent=1 // pred_region
      %s16 = ssub.s32 8192, 8192
      %17 = vsyncadd [#allocation3], %s16
      %s18 = sshll.u32 [#allocation2], 4
      %s19 = int_to_ptr.vmem [resolvable:$true] %s18
      %24 = dma.hbm_to_vmem [thread:$0]  %s0, 8192, %s19, [#allocation3], 256, 256, 16
    $region5: #{tpu_custom_call.1} parent=1 // pred_fallthru
      _
    // Predicated region
    $region6: #{tpu_custom_call.1} parent=1 // pred_check
      _
    $region7: #{tpu_custom_call.1} parent=1 // pred_check_branch
      %26 = sbr.rel (0) target = $region9
    $region8: #{tpu_custom_call.1} parent=1 // pred_region
      %s28 = ssub.s32 2048, 2048
      %29 = vsyncadd [#allocation6], %s28
      %s30 = sshll.u32 [#allocation5], 4
      %s31 = int_to_ptr.vmem [resolvable:$true] %s30
      %36 = dma.hbm_to_vmem [thread:$0]  %s1, 2048, %s31, [#allocation6], 64, 64, 4
    $region9: #{tpu_custom_call.1} parent=1 // pred_fallthru
      _
    // Predicated region
    $region10: #{tpu_custom_call.1} parent=1 // pred_check
      _
    $region11: #{tpu_custom_call.1} parent=1 // pred_check_branch
      %38 = sbr.rel (0) target = $region13
    $region12: #{tpu_custom_call.1} parent=1 // pred_region
      _
    $region13: #{tpu_custom_call.1} parent=1 // pred_fallthru
      _
    // Predicated region
    $region14: #{tpu_custom_call.1} parent=1 // pred_check
      _
    $region15: #{tpu_custom_call.1} parent=1 // pred_check_branch
      %40 = sbr.rel (0) target = $region17
    $region16: #{tpu_custom_call.1} parent=1 // pred_region
      %s42 = ssub.s32 2048, 2048
      %43 = vsyncadd [#allocation6], %s42
      %s44 = sshll.u32 [#allocation7], 4
      %s45 = int_to_ptr.vmem [resolvable:$true] %s44
      %50 = dma.hbm_to_vmem [thread:$0]  %s3, 2048, %s45, [#allocation6], 128, 128, 8
    $region17: #{tpu_custom_call.1} parent=1 // pred_fallthru
      _
    // Predicated region
    $region18: #{tpu_custom_call.1} parent=1 // pred_check
      _
    $region19: #{tpu_custom_call.1} parent=1 // pred_check_branch
      %52 = sbr.rel (0) target = $region21
    $region20: #{tpu_custom_call.1} parent=1 // pred_region
      _
    $region21: #{tpu_custom_call.1} parent=1 // pred_fallthru
      _
    // Predicated region
    $region22: #{tpu_custom_call.1} parent=1 // pred_check
      _
    $region23: #{tpu_custom_call.1} parent=1 // pred_check_branch
      %54 = sbr.rel (0) target = $region25
    $region24: #{tpu_custom_call.1} parent=1 // pred_region
      %55 = dma.done [#allocation3], 8192
    $region25: #{tpu_custom_call.1} parent=1 // pred_fallthru
      _
    // Predicated region
    $region26: #{tpu_custom_call.1} parent=1 // pred_check
      _
    $region27: #{tpu_custom_call.1} parent=1 // pred_check_branch
      %57 = sbr.rel (0) target = $region29
    $region28: #{tpu_custom_call.1} parent=1 // pred_region
      %58 = dma.done [#allocation6], 2048
    $region29: #{tpu_custom_call.1} parent=1 // pred_fallthru
      _
    // Predicated region
    $region30: #{tpu_custom_call.1} parent=1 // pred_check
      _
    $region31: #{tpu_custom_call.1} parent=1 // pred_check_branch
      %60 = sbr.rel (0) target = $region33
    $region32: #{tpu_custom_call.1} parent=1 // pred_region
      %61 = dma.done [#allocation6], 2048
    $region33: #{tpu_custom_call.1} parent=1 // pred_fallthru
      _
    %v63 = vld [vmem:[#allocation2] sm:$0xff]
    %v64 = vld [vmem:[#allocation2 + $0x8] sm:$0xff]
    %v65 = vld [vmem:[#allocation2 + $0x10] sm:$0xff]
    %v66 = vld [vmem:[#allocation2 + $0x18] sm:$0xff]
    %v67 = vld [vmem:[#allocation2 + $0x20] sm:$0xff]
    %v68 = vld [vmem:[#allocation2 + $0x28] sm:$0xff]
    %v69 = vld [vmem:[#allocation2 + $0x30] sm:$0xff]
    %v70 = vld [vmem:[#allocation2 + $0x38] sm:$0xff]
    %v71 = vld [vmem:[#allocation2 + $0x40] sm:$0xff]
    %v72 = vld [vmem:[#allocation2 + $0x48] sm:$0xff]
    %v73 = vld [vmem:[#allocation2 + $0x50] sm:$0xff]
    %v74 = vld [vmem:[#allocation2 + $0x58] sm:$0xff]
    %v75 = vld [vmem:[#allocation2 + $0x60] sm:$0xff]
    %v76 = vld [vmem:[#allocation2 + $0x68] sm:$0xff]
    %v77 = vld [vmem:[#allocation2 + $0x70] sm:$0xff]
    %v78 = vld [vmem:[#allocation2 + $0x78] sm:$0xff]
    %v79 = vld [vmem:[#allocation2 + $0x80] sm:$0xff]
    %v80 = vld [vmem:[#allocation2 + $0x88] sm:$0xff]
    %v81 = vld [vmem:[#allocation2 + $0x90] sm:$0xff]
    %v82 = vld [vmem:[#allocation2 + $0x98] sm:$0xff]
    %v83 = vld [vmem:[#allocation2 + $0xa0] sm:$0xff]
    %v84 = vld [vmem:[#allocation2 + $0xa8] sm:$0xff]
    %v85 = vld [vmem:[#allocation2 + $0xb0] sm:$0xff]
    %v86 = vld [vmem:[#allocation2 + $0xb8] sm:$0xff]
    %v87 = vld [vmem:[#allocation2 + $0xc0] sm:$0xff]
    %v88 = vld [vmem:[#allocation2 + $0xc8] sm:$0xff]
    %v89 = vld [vmem:[#allocation2 + $0xd0] sm:$0xff]
    %v90 = vld [vmem:[#allocation2 + $0xd8] sm:$0xff]
    %v91 = vld [vmem:[#allocation2 + $0xe0] sm:$0xff]
    %v92 = vld [vmem:[#allocation2 + $0xe8] sm:$0xff]
    %v93 = vld [vmem:[#allocation2 + $0xf0] sm:$0xff]
    %v94 = vld [vmem:[#allocation2 + $0xf8] sm:$0xff]
    %v95 = vld [vmem:[#allocation2 + $0x100] sm:$0xff]
    %v96 = vld [vmem:[#allocation2 + $0x108] sm:$0xff]
    %v97 = vld [vmem:[#allocation2 + $0x110] sm:$0xff]
    %v98 = vld [vmem:[#allocation2 + $0x118] sm:$0xff]
    %v99 = vld [vmem:[#allocation2 + $0x120] sm:$0xff]
    %v100 = vld [vmem:[#allocation2 + $0x128] sm:$0xff]
    %v101 = vld [vmem:[#allocation2 + $0x130] sm:$0xff]
    %v102 = vld [vmem:[#allocation2 + $0x138] sm:$0xff]
    %v103 = vld [vmem:[#allocation2 + $0x140] sm:$0xff]
    %v104 = vld [vmem:[#allocation2 + $0x148] sm:$0xff]
    %v105 = vld [vmem:[#allocation2 + $0x150] sm:$0xff]
    %v106 = vld [vmem:[#allocation2 + $0x158] sm:$0xff]
    %v107 = vld [vmem:[#allocation2 + $0x160] sm:$0xff]
    %v108 = vld [vmem:[#allocation2 + $0x168] sm:$0xff]
    %v109 = vld [vmem:[#allocation2 + $0x170] sm:$0xff]
    %v110 = vld [vmem:[#allocation2 + $0x178] sm:$0xff]
    %v111 = vld [vmem:[#allocation2 + $0x180] sm:$0xff]
    %v112 = vld [vmem:[#allocation2 + $0x188] sm:$0xff]
    %v113 = vld [vmem:[#allocation2 + $0x190] sm:$0xff]
    %v114 = vld [vmem:[#allocation2 + $0x198] sm:$0xff]
    %v115 = vld [vmem:[#allocation2 + $0x1a0] sm:$0xff]
    %v116 = vld [vmem:[#allocation2 + $0x1a8] sm:$0xff]
    %v117 = vld [vmem:[#allocation2 + $0x1b0] sm:$0xff]
    %v118 = vld [vmem:[#allocation2 + $0x1b8] sm:$0xff]
    %v119 = vld [vmem:[#allocation2 + $0x1c0] sm:$0xff]
    %v120 = vld [vmem:[#allocation2 + $0x1c8] sm:$0xff]
    %v121 = vld [vmem:[#allocation2 + $0x1d0] sm:$0xff]
    %v122 = vld [vmem:[#allocation2 + $0x1d8] sm:$0xff]
    %v123 = vld [vmem:[#allocation2 + $0x1e0] sm:$0xff]
    %v124 = vld [vmem:[#allocation2 + $0x1e8] sm:$0xff]
    %v125 = vld [vmem:[#allocation2 + $0x1f0] sm:$0xff]
    %v126 = vld [vmem:[#allocation2 + $0x1f8] sm:$0xff]
    %v127 = vpack.c.bf16 %v65, %v63
    %v128 = vpack.c.bf16 %v66, %v64
    %v129 = vpack.c.bf16 %v69, %v67
    %v130 = vpack.c.bf16 %v70, %v68
    %v131 = vpack.c.bf16 %v73, %v71
    %v132 = vpack.c.bf16 %v74, %v72
    %v133 = vpack.c.bf16 %v77, %v75
    %v134 = vpack.c.bf16 %v78, %v76
    %v135 = vpack.c.bf16 %v81, %v79
    %v136 = vpack.c.bf16 %v82, %v80
    %v137 = vpack.c.bf16 %v85, %v83
    %v138 = vpack.c.bf16 %v86, %v84
    %v139 = vpack.c.bf16 %v89, %v87
    %v140 = vpack.c.bf16 %v90, %v88
    %v141 = vpack.c.bf16 %v93, %v91
    %v142 = vpack.c.bf16 %v94, %v92
    %v143 = vpack.c.bf16 %v97, %v95
    %v144 = vpack.c.bf16 %v98, %v96
    %v145 = vpack.c.bf16 %v101, %v99
    %v146 = vpack.c.bf16 %v102, %v100
    %v147 = vpack.c.bf16 %v105, %v103
    %v148 = vpack.c.bf16 %v106, %v104
    %v149 = vpack.c.bf16 %v109, %v107
    %v150 = vpack.c.bf16 %v110, %v108
    %v151 = vpack.c.bf16 %v113, %v111
    %v152 = vpack.c.bf16 %v114, %v112
    %v153 = vpack.c.bf16 %v117, %v115
    %v154 = vpack.c.bf16 %v118, %v116
    %v155 = vpack.c.bf16 %v121, %v119
    %v156 = vpack.c.bf16 %v122, %v120
    %v157 = vpack.c.bf16 %v125, %v123
    %v158 = vpack.c.bf16 %v126, %v124
    %v159 = vld [vmem:[#allocation5] sm:$0xf]
    %v160 = vld [vmem:[#allocation5 + $0x4] sm:$0xf]
    %v161 = vld [vmem:[#allocation5 + $0x8] sm:$0xf]
    %v162 = vld [vmem:[#allocation5 + $0xc] sm:$0xf]
    %v163 = vld [vmem:[#allocation5 + $0x10] sm:$0xf]
    %v164 = vld [vmem:[#allocation5 + $0x14] sm:$0xf]
    %v165 = vld [vmem:[#allocation5 + $0x18] sm:$0xf]
    %v166 = vld [vmem:[#allocation5 + $0x1c] sm:$0xf]
    %v167 = vld [vmem:[#allocation5 + $0x20] sm:$0xf]
    %v168 = vld [vmem:[#allocation5 + $0x24] sm:$0xf]
    %v169 = vld [vmem:[#allocation5 + $0x28] sm:$0xf]
    %v170 = vld [vmem:[#allocation5 + $0x2c] sm:$0xf]
    %v171 = vld [vmem:[#allocation5 + $0x30] sm:$0xf]
    %v172 = vld [vmem:[#allocation5 + $0x34] sm:$0xf]
    %v173 = vld [vmem:[#allocation5 + $0x38] sm:$0xf]
    %v174 = vld [vmem:[#allocation5 + $0x3c] sm:$0xf]
    %v175 = vld [vmem:[#allocation5 + $0x40] sm:$0xf]
    %v176 = vld [vmem:[#allocation5 + $0x44] sm:$0xf]
    %v177 = vld [vmem:[#allocation5 + $0x48] sm:$0xf]
    %v178 = vld [vmem:[#allocation5 + $0x4c] sm:$0xf]
    %v179 = vld [vmem:[#allocation5 + $0x50] sm:$0xf]
    %v180 = vld [vmem:[#allocation5 + $0x54] sm:$0xf]
    %v181 = vld [vmem:[#allocation5 + $0x58] sm:$0xf]
    %v182 = vld [vmem:[#allocation5 + $0x5c] sm:$0xf]
    %v183 = vld [vmem:[#allocation5 + $0x60] sm:$0xf]
    %v184 = vld [vmem:[#allocation5 + $0x64] sm:$0xf]
    %v185 = vld [vmem:[#allocation5 + $0x68] sm:$0xf]
    %v186 = vld [vmem:[#allocation5 + $0x6c] sm:$0xf]
    %v187 = vld [vmem:[#allocation5 + $0x70] sm:$0xf]
    %v188 = vld [vmem:[#allocation5 + $0x74] sm:$0xf]
    %v189 = vld [vmem:[#allocation5 + $0x78] sm:$0xf]
    %v190 = vld [vmem:[#allocation5 + $0x7c] sm:$0xf]
    %v191 = vld [vmem:[%s2] sm:$0x1]
    %v193 = vlaneseq
    %v194 = vshrl.u32 %v193, 7
    %v195 = vsub.s32 0, %v194
    %v196 = vrot.slane %v191, %v195
    %v230 = vunpack.c.l.b16 %v159
    %v231 = vunpack.c.l.b16 %v160
    %v232 = vunpack.c.l.b16 %v161
    %v233 = vunpack.c.l.b16 %v162
    %v234 = vunpack.c.l.b16 %v163
    %v235 = vunpack.c.l.b16 %v164
    %v236 = vunpack.c.l.b16 %v165
    %v237 = vunpack.c.l.b16 %v166
    %v238 = vunpack.c.l.b16 %v167
    %v239 = vunpack.c.l.b16 %v168
    %v240 = vunpack.c.l.b16 %v169
    %v241 = vunpack.c.l.b16 %v170
    %v242 = vunpack.c.l.b16 %v171
    %v243 = vunpack.c.l.b16 %v172
    %v244 = vunpack.c.l.b16 %v173
    %v245 = vunpack.c.l.b16 %v174
    %v246 = vunpack.c.l.b16 %v175
    %v247 = vunpack.c.l.b16 %v176
    %v248 = vunpack.c.l.b16 %v177
    %v249 = vunpack.c.l.b16 %v178
    %v250 = vunpack.c.l.b16 %v179
    %v251 = vunpack.c.l.b16 %v180
    %v252 = vunpack.c.l.b16 %v181
    %v253 = vunpack.c.l.b16 %v182
    %v254 = vunpack.c.l.b16 %v183
    %v255 = vunpack.c.l.b16 %v184
    %v256 = vunpack.c.l.b16 %v185
    %v257 = vunpack.c.l.b16 %v186
    %v258 = vunpack.c.l.b16 %v187
    %v259 = vunpack.c.l.b16 %v188
    %v260 = vunpack.c.l.b16 %v189
    %v261 = vunpack.c.l.b16 %v190
    %v262 = vpack.c.b16 %v231, %v230
    %v263 = vpack.c.b16 %v233, %v232
    %v264 = vpack.c.b16 %v235, %v234
    %v265 = vpack.c.b16 %v237, %v236
    %v266 = vpack.c.b16 %v239, %v238
    %v267 = vpack.c.b16 %v241, %v240
    %v268 = vpack.c.b16 %v243, %v242
    %v269 = vpack.c.b16 %v245, %v244
    %v270 = vpack.c.b16 %v247, %v246
    %v271 = vpack.c.b16 %v249, %v248
    %v272 = vpack.c.b16 %v251, %v250
    %v273 = vpack.c.b16 %v253, %v252
    %v274 = vpack.c.b16 %v255, %v254
    %v275 = vpack.c.b16 %v257, %v256
    %v276 = vpack.c.b16 %v259, %v258
    %v277 = vpack.c.b16 %v261, %v260
    %294 = vmatprep.subr.bf16.mxu0 0
    %295 = vmatpush1.bf16.msra.mxu0 %v262
    %296 = vmatprep.subr.bf16.mxu0 0
    %297 = vmatpush1.bf16.msra.mxu0 %v263
    %298 = vmatprep.subr.bf16.mxu0 0
    %299 = vmatpush1.bf16.msra.mxu0 %v264
    %300 = vmatprep.subr.bf16.mxu0 0
    %301 = vmatpush1.bf16.msra.mxu0 %v265
    %302 = vmatprep.subr.bf16.mxu0 0
    %303 = vmatpush1.bf16.msra.mxu0 %v266
    %304 = vmatprep.subr.bf16.mxu0 0
    %305 = vmatpush1.bf16.msra.mxu0 %v267
    %306 = vmatprep.subr.bf16.mxu0 0
    %307 = vmatpush1.bf16.msra.mxu0 %v268
    %308 = vmatprep.subr.bf16.mxu0 0
    %309 = vmatpush1.bf16.msra.mxu0 %v269
    %310 = vmatprep.subr.bf16.mxu0 0
    %311 = vmatpush1.bf16.msra.mxu0 %v270
    %312 = vmatprep.subr.bf16.mxu0 0
    %313 = vmatpush1.bf16.msra.mxu0 %v271
    %314 = vmatprep.subr.bf16.mxu0 0
    %315 = vmatpush1.bf16.msra.mxu0 %v272
    %316 = vmatprep.subr.bf16.mxu0 0
    %317 = vmatpush1.bf16.msra.mxu0 %v273
    %318 = vmatprep.subr.bf16.mxu0 0
    %319 = vmatpush1.bf16.msra.mxu0 %v274
    %320 = vmatprep.subr.bf16.mxu0 0
    %321 = vmatpush1.bf16.msra.mxu0 %v275
    %322 = vmatprep.subr.bf16.mxu0 0
    %323 = vmatpush1.bf16.msra.mxu0 %v276
    %324 = vmatprep.subr.bf16.mxu0 0
    %325 = vmatpush1.bf16.msra.mxu0 %v277
    %326 = vmatprep.mubr.bf16.mxu0 %v128
    %327 = vmatmul.mubr.bf16.gmra.mrb[0].mxu0 %v127
    %v328 = vpop.f32.mrb[0].mxu0
    %v329 = vadd.f32 %v196, %v328
    %v330 = vpop.f32.mrb[0].mxu0
    %v331 = vpop.f32.mrb[0].mxu0
    %v332 = vadd.f32 %v196, %v331
    %v333 = vpop.f32.mrb[0].mxu0
    %334 = vmatprep.mubr.bf16.mxu0 %v130
    %335 = vmatmul.mubr.bf16.gmra.mrb[0].mxu0 %v129
    %v336 = vpop.f32.mrb[0].mxu0
    %v337 = vadd.f32 %v196, %v336
    %v338 = vpop.f32.mrb[0].mxu0
    %v339 = vpop.f32.mrb[0].mxu0
    %v340 = vadd.f32 %v196, %v339
    %v341 = vpop.f32.mrb[0].mxu0
    %342 = vmatprep.mubr.bf16.mxu0 %v132
    %343 = vmatmul.mubr.bf16.gmra.mrb[0].mxu0 %v131
    %v344 = vpop.f32.mrb[0].mxu0
    %v345 = vadd.f32 %v196, %v344
    %v346 = vpop.f32.mrb[0].mxu0
    %v347 = vpop.f32.mrb[0].mxu0
    %v348 = vadd.f32 %v196, %v347
    %v349 = vpop.f32.mrb[0].mxu0
    %350 = vmatprep.mubr.bf16.mxu0 %v134
    %351 = vmatmul.mubr.bf16.gmra.mrb[0].mxu0 %v133
    %v352 = vpop.f32.mrb[0].mxu0
    %v353 = vadd.f32 %v196, %v352
    %v354 = vpop.f32.mrb[0].mxu0
    %v355 = vpop.f32.mrb[0].mxu0
    %v356 = vadd.f32 %v196, %v355
    %v357 = vpop.f32.mrb[0].mxu0
    %358 = vmatprep.mubr.bf16.mxu0 %v136
    %359 = vmatmul.mubr.bf16.gmra.mrb[0].mxu0 %v135
    %v360 = vpop.f32.mrb[0].mxu0
    %v361 = vadd.f32 %v196, %v360
    %v362 = vpop.f32.mrb[0].mxu0
    %v363 = vpop.f32.mrb[0].mxu0
    %v364 = vadd.f32 %v196, %v363
    %v365 = vpop.f32.mrb[0].mxu0
    %366 = vmatprep.mubr.bf16.mxu0 %v138
    %367 = vmatmul.mubr.bf16.gmra.mrb[0].mxu0 %v137
    %v368 = vpop.f32.mrb[0].mxu0
    %v369 = vadd.f32 %v196, %v368
    %v370 = vpop.f32.mrb[0].mxu0
    %v371 = vpop.f32.mrb[0].mxu0
    %v372 = vadd.f32 %v196, %v371
    %v373 = vpop.f32.mrb[0].mxu0
    %374 = vmatprep.mubr.bf16.mxu0 %v140
    %375 = vmatmul.mubr.bf16.gmra.mrb[0].mxu0 %v139
    %v376 = vpop.f32.mrb[0].mxu0
    %v377 = vadd.f32 %v196, %v376
    %v378 = vpop.f32.mrb[0].mxu0
    %v379 = vpop.f32.mrb[0].mxu0
    %v380 = vadd.f32 %v196, %v379
    %v381 = vpop.f32.mrb[0].mxu0
    %382 = vmatprep.mubr.bf16.mxu0 %v142
    %383 = vmatmul.mubr.bf16.gmra.mrb[0].mxu0 %v141
    %v384 = vpop.f32.mrb[0].mxu0
    %v385 = vadd.f32 %v196, %v384
    %v386 = vpop.f32.mrb[0].mxu0
    %v387 = vpop.f32.mrb[0].mxu0
    %v388 = vadd.f32 %v196, %v387
    %v389 = vpop.f32.mrb[0].mxu0
    %390 = vmatprep.mubr.bf16.mxu0 %v144
    %391 = vmatmul.mubr.bf16.gmra.mrb[0].mxu0 %v143
    %v392 = vpop.f32.mrb[0].mxu0
    %v393 = vadd.f32 %v196, %v392
    %v394 = vpop.f32.mrb[0].mxu0
    %v395 = vpop.f32.mrb[0].mxu0
    %v396 = vadd.f32 %v196, %v395
    %v397 = vpop.f32.mrb[0].mxu0
    %398 = vmatprep.mubr.bf16.mxu0 %v146
    %399 = vmatmul.mubr.bf16.gmra.mrb[0].mxu0 %v145
    %v400 = vpop.f32.mrb[0].mxu0
    %v401 = vadd.f32 %v196, %v400
    %v402 = vpop.f32.mrb[0].mxu0
    %v403 = vpop.f32.mrb[0].mxu0
    %v404 = vadd.f32 %v196, %v403
    %v405 = vpop.f32.mrb[0].mxu0
    %406 = vmatprep.mubr.bf16.mxu0 %v148
    %407 = vmatmul.mubr.bf16.gmra.mrb[0].mxu0 %v147
    %v408 = vpop.f32.mrb[0].mxu0
    %v409 = vadd.f32 %v196, %v408
    %v410 = vpop.f32.mrb[0].mxu0
    %v411 = vpop.f32.mrb[0].mxu0
    %v412 = vadd.f32 %v196, %v411
    %v413 = vpop.f32.mrb[0].mxu0
    %414 = vmatprep.mubr.bf16.mxu0 %v150
    %415 = vmatmul.mubr.bf16.gmra.mrb[0].mxu0 %v149
    %v416 = vpop.f32.mrb[0].mxu0
    %v417 = vadd.f32 %v196, %v416
    %v418 = vpop.f32.mrb[0].mxu0
    %v419 = vpop.f32.mrb[0].mxu0
    %v420 = vadd.f32 %v196, %v419
    %v421 = vpop.f32.mrb[0].mxu0
    %422 = vmatprep.mubr.bf16.mxu0 %v152
    %423 = vmatmul.mubr.bf16.gmra.mrb[0].mxu0 %v151
    %v424 = vpop.f32.mrb[0].mxu0
    %v425 = vadd.f32 %v196, %v424
    %v426 = vpop.f32.mrb[0].mxu0
    %v427 = vpop.f32.mrb[0].mxu0
    %v428 = vadd.f32 %v196, %v427
    %v429 = vpop.f32.mrb[0].mxu0
    %430 = vmatprep.mubr.bf16.mxu0 %v154
    %431 = vmatmul.mubr.bf16.gmra.mrb[0].mxu0 %v153
    %v432 = vpop.f32.mrb[0].mxu0
    %v433 = vadd.f32 %v196, %v432
    %v434 = vpop.f32.mrb[0].mxu0
    %v435 = vpop.f32.mrb[0].mxu0
    %v436 = vadd.f32 %v196, %v435
    %v437 = vpop.f32.mrb[0].mxu0
    %438 = vmatprep.mubr.bf16.mxu0 %v156
    %439 = vmatmul.mubr.bf16.gmra.mrb[0].mxu0 %v155
    %v440 = vpop.f32.mrb[0].mxu0
    %v441 = vadd.f32 %v196, %v440
    %v442 = vpop.f32.mrb[0].mxu0
    %v443 = vpop.f32.mrb[0].mxu0
    %v444 = vadd.f32 %v196, %v443
    %v445 = vpop.f32.mrb[0].mxu0
    %446 = vmatprep.mubr.bf16.mxu0 %v158
    %447 = vmatmul.mubr.bf16.gmra.mrb[0].mxu0 %v157
    %v448 = vpop.f32.mrb[0].mxu0
    %v449 = vadd.f32 %v196, %v448
    %v450 = vpop.f32.mrb[0].mxu0
    %v451 = vpop.f32.mrb[0].mxu0
    %v452 = vadd.f32 %v196, %v451
    %v453 = vpop.f32.mrb[0].mxu0
    %454 = vdwg.mxu0
    %v455 = vmax.f32 %v329, 0.0
    %v456 = vmax.f32 %v332, 0.0
    %v457 = vmax.f32 %v337, 0.0
    %v458 = vmax.f32 %v340, 0.0
    %v459 = vmax.f32 %v345, 0.0
    %v460 = vmax.f32 %v348, 0.0
    %v461 = vmax.f32 %v353, 0.0
    %v462 = vmax.f32 %v356, 0.0
    %v463 = vmax.f32 %v361, 0.0
    %v464 = vmax.f32 %v364, 0.0
    %v465 = vmax.f32 %v369, 0.0
    %v466 = vmax.f32 %v372, 0.0
    %v467 = vmax.f32 %v377, 0.0
    %v468 = vmax.f32 %v380, 0.0
    %v469 = vmax.f32 %v385, 0.0
    %v470 = vmax.f32 %v388, 0.0
    %v471 = vmax.f32 %v393, 0.0
    %v472 = vmax.f32 %v396, 0.0
    %v473 = vmax.f32 %v401, 0.0
    %v474 = vmax.f32 %v404, 0.0
    %v475 = vmax.f32 %v409, 0.0
    %v476 = vmax.f32 %v412, 0.0
    %v477 = vmax.f32 %v417, 0.0
    %v478 = vmax.f32 %v420, 0.0
    %v479 = vmax.f32 %v425, 0.0
    %v480 = vmax.f32 %v428, 0.0
    %v481 = vmax.f32 %v433, 0.0
    %v482 = vmax.f32 %v436, 0.0
    %v483 = vmax.f32 %v441, 0.0
    %v484 = vmax.f32 %v444, 0.0
    %v485 = vmax.f32 %v449, 0.0
    %v486 = vmax.f32 %v452, 0.0
    %v487 = vpack.c.bf16 %v456, %v455
    %v488 = vpack.c.bf16 %v458, %v457
    %v489 = vpack.c.bf16 %v460, %v459
    %v490 = vpack.c.bf16 %v462, %v461
    %v491 = vpack.c.bf16 %v464, %v463
    %v492 = vpack.c.bf16 %v466, %v465
    %v493 = vpack.c.bf16 %v468, %v467
    %v494 = vpack.c.bf16 %v470, %v469
    %v495 = vpack.c.bf16 %v472, %v471
    %v496 = vpack.c.bf16 %v474, %v473
    %v497 = vpack.c.bf16 %v476, %v475
    %v498 = vpack.c.bf16 %v478, %v477
    %v499 = vpack.c.bf16 %v480, %v479
    %v500 = vpack.c.bf16 %v482, %v481
    %v501 = vpack.c.bf16 %v484, %v483
    %v502 = vpack.c.bf16 %v486, %v485
    %v503 = vld [vmem:[#allocation7] sm:$0xff]
    %v504 = vld [vmem:[#allocation7 + $0x8] sm:$0xff]
    %v505 = vld [vmem:[#allocation7 + $0x10] sm:$0xff]
    %v506 = vld [vmem:[#allocation7 + $0x18] sm:$0xff]
    %v507 = vld [vmem:[#allocation7 + $0x20] sm:$0xff]
    %v508 = vld [vmem:[#allocation7 + $0x28] sm:$0xff]
    %v509 = vld [vmem:[#allocation7 + $0x30] sm:$0xff]
    %v510 = vld [vmem:[#allocation7 + $0x38] sm:$0xff]
    %v511 = vld [vmem:[#allocation7 + $0x40] sm:$0xff]
    %v512 = vld [vmem:[#allocation7 + $0x48] sm:$0xff]
    %v513 = vld [vmem:[#allocation7 + $0x50] sm:$0xff]
    %v514 = vld [vmem:[#allocation7 + $0x58] sm:$0xff]
    %v515 = vld [vmem:[#allocation7 + $0x60] sm:$0xff]
    %v516 = vld [vmem:[#allocation7 + $0x68] sm:$0xff]
    %v517 = vld [vmem:[#allocation7 + $0x70] sm:$0xff]
    %v518 = vld [vmem:[#allocation7 + $0x78] sm:$0xff]
    %v519 = vld [vmem:[%s4] sm:$0x3]
    %v521 = vlaneseq
    %v522 = vshrl.u32 %v521, 7
    %v523 = vsub.s32 0, %v522
    %v524 = vrot.slane %v519, %v523
    %v525 = vlaneseq
    %v526 = vshrl.u32 %v525, 7
    %v527 = vsub.s32 1, %v526
    %v528 = vrot.slane %v519, %v527
    %v547 = vunpack.c.l.b16 %v503
    %v548 = vunpack.c.h.b16 %v503
    %v549 = vunpack.c.l.b16 %v504
    %v550 = vunpack.c.h.b16 %v504
    %v551 = vunpack.c.l.b16 %v505
    %v552 = vunpack.c.h.b16 %v505
    %v553 = vunpack.c.l.b16 %v506
    %v554 = vunpack.c.h.b16 %v506
    %v555 = vunpack.c.l.b16 %v507
    %v556 = vunpack.c.h.b16 %v507
    %v557 = vunpack.c.l.b16 %v508
    %v558 = vunpack.c.h.b16 %v508
    %v559 = vunpack.c.l.b16 %v509
    %v560 = vunpack.c.h.b16 %v509
    %v561 = vunpack.c.l.b16 %v510
    %v562 = vunpack.c.h.b16 %v510
    %v563 = vunpack.c.l.b16 %v511
    %v564 = vunpack.c.h.b16 %v511
    %v565 = vunpack.c.l.b16 %v512
    %v566 = vunpack.c.h.b16 %v512
    %v567 = vunpack.c.l.b16 %v513
    %v568 = vunpack.c.h.b16 %v513
    %v569 = vunpack.c.l.b16 %v514
    %v570 = vunpack.c.h.b16 %v514
    %v571 = vunpack.c.l.b16 %v515
    %v572 = vunpack.c.h.b16 %v515
    %v573 = vunpack.c.l.b16 %v516
    %v574 = vunpack.c.h.b16 %v516
    %v575 = vunpack.c.l.b16 %v517
    %v576 = vunpack.c.h.b16 %v517
    %v577 = vunpack.c.l.b16 %v518
    %v578 = vunpack.c.h.b16 %v518
    %v579 = vpack.c.b16 %v549, %v547
    %v580 = vpack.c.b16 %v550, %v548
    %v581 = vpack.c.b16 %v553, %v551
    %v582 = vpack.c.b16 %v554, %v552
    %v583 = vpack.c.b16 %v557, %v555
    %v584 = vpack.c.b16 %v558, %v556
    %v585 = vpack.c.b16 %v561, %v559
    %v586 = vpack.c.b16 %v562, %v560
    %v587 = vpack.c.b16 %v565, %v563
    %v588 = vpack.c.b16 %v566, %v564
    %v589 = vpack.c.b16 %v569, %v567
    %v590 = vpack.c.b16 %v570, %v568
    %v591 = vpack.c.b16 %v573, %v571
    %v592 = vpack.c.b16 %v574, %v572
    %v593 = vpack.c.b16 %v577, %v575
    %v594 = vpack.c.b16 %v578, %v576
    %611 = vmatprep.subr.bf16.mxu0 %v580
    %612 = vmatpush1.bf16.msra.mxu0 %v579
    %613 = vmatprep.subr.bf16.mxu0 %v582
    %614 = vmatpush1.bf16.msra.mxu0 %v581
    %615 = vmatprep.subr.bf16.mxu0 %v584
    %616 = vmatpush1.bf16.msra.mxu0 %v583
    %617 = vmatprep.subr.bf16.mxu0 %v586
    %618 = vmatpush1.bf16.msra.mxu0 %v585
    %619 = vmatprep.subr.bf16.mxu0 %v588
    %620 = vmatpush1.bf16.msra.mxu0 %v587
    %621 = vmatprep.subr.bf16.mxu0 %v590
    %622 = vmatpush1.bf16.msra.mxu0 %v589
    %623 = vmatprep.subr.bf16.mxu0 %v592
    %624 = vmatpush1.bf16.msra.mxu0 %v591
    %625 = vmatprep.subr.bf16.mxu0 %v594
    %626 = vmatpush1.bf16.msra.mxu0 %v593
    %627 = vmatprep.subr.bf16.mxu0 0
    %628 = vmatpush1.bf16.msra.mxu0 0
    %629 = vmatprep.subr.bf16.mxu0 0
    %630 = vmatpush1.bf16.msra.mxu0 0
    %631 = vmatprep.subr.bf16.mxu0 0
    %632 = vmatpush1.bf16.msra.mxu0 0
    %633 = vmatprep.subr.bf16.mxu0 0
    %634 = vmatpush1.bf16.msra.mxu0 0
    %635 = vmatprep.subr.bf16.mxu0 0
    %636 = vmatpush1.bf16.msra.mxu0 0
    %637 = vmatprep.subr.bf16.mxu0 0
    %638 = vmatpush1.bf16.msra.mxu0 0
    %639 = vmatprep.subr.bf16.mxu0 0
    %640 = vmatpush1.bf16.msra.mxu0 0
    %641 = vmatprep.subr.bf16.mxu0 0
    %642 = vmatpush1.bf16.msra.mxu0 0
    %643 = vmatprep.mubr.bf16.mxu0 0
    %644 = vmatmul.mubr.bf16.gmra.mrb[0].mxu0 %v487
    %v645 = vpop.f32.mrb[0].mxu0
    %v646 = vadd.f32 %v524, %v645
    %v647 = vpop.f32.mrb[0].mxu0
    %v648 = vadd.f32 %v528, %v647
    %v649 = vpop.f32.mrb[0].mxu0
    %v650 = vadd.f32 %v524, %v649
    %v651 = vpop.f32.mrb[0].mxu0
    %v652 = vadd.f32 %v528, %v651
    %653 = vmatprep.mubr.bf16.mxu0 0
    %654 = vmatmul.mubr.bf16.gmra.mrb[0].mxu0 %v488
    %v655 = vpop.f32.mrb[0].mxu0
    %v656 = vadd.f32 %v524, %v655
    %v657 = vpop.f32.mrb[0].mxu0
    %v658 = vadd.f32 %v528, %v657
    %v659 = vpop.f32.mrb[0].mxu0
    %v660 = vadd.f32 %v524, %v659
    %v661 = vpop.f32.mrb[0].mxu0
    %v662 = vadd.f32 %v528, %v661
    %663 = vmatprep.mubr.bf16.mxu0 0
    %664 = vmatmul.mubr.bf16.gmra.mrb[0].mxu0 %v489
    %v665 = vpop.f32.mrb[0].mxu0
    %v666 = vadd.f32 %v524, %v665
    %v667 = vpop.f32.mrb[0].mxu0
    %v668 = vadd.f32 %v528, %v667
    %v669 = vpop.f32.mrb[0].mxu0
    %v670 = vadd.f32 %v524, %v669
    %v671 = vpop.f32.mrb[0].mxu0
    %v672 = vadd.f32 %v528, %v671
    %673 = vmatprep.mubr.bf16.mxu0 0
    %674 = vmatmul.mubr.bf16.gmra.mrb[0].mxu0 %v490
    %v675 = vpop.f32.mrb[0].mxu0
    %v676 = vadd.f32 %v524, %v675
    %v677 = vpop.f32.mrb[0].mxu0
    %v678 = vadd.f32 %v528, %v677
    %v679 = vpop.f32.mrb[0].mxu0
    %v680 = vadd.f32 %v524, %v679
    %v681 = vpop.f32.mrb[0].mxu0
    %v682 = vadd.f32 %v528, %v681
    %683 = vmatprep.mubr.bf16.mxu0 0
    %684 = vmatmul.mubr.bf16.gmra.mrb[0].mxu0 %v491
    %v685 = vpop.f32.mrb[0].mxu0
    %v686 = vadd.f32 %v524, %v685
    %v687 = vpop.f32.mrb[0].mxu0
    %v688 = vadd.f32 %v528, %v687
    %v689 = vpop.f32.mrb[0].mxu0
    %v690 = vadd.f32 %v524, %v689
    %v691 = vpop.f32.mrb[0].mxu0
    %v692 = vadd.f32 %v528, %v691
    %693 = vmatprep.mubr.bf16.mxu0 0
    %694 = vmatmul.mubr.bf16.gmra.mrb[0].mxu0 %v492
    %v695 = vpop.f32.mrb[0].mxu0
    %v696 = vadd.f32 %v524, %v695
    %v697 = vpop.f32.mrb[0].mxu0
    %v698 = vadd.f32 %v528, %v697
    %v699 = vpop.f32.mrb[0].mxu0
    %v700 = vadd.f32 %v524, %v699
    %v701 = vpop.f32.mrb[0].mxu0
    %v702 = vadd.f32 %v528, %v701
    %703 = vmatprep.mubr.bf16.mxu0 0
    %704 = vmatmul.mubr.bf16.gmra.mrb[0].mxu0 %v493
    %v705 = vpop.f32.mrb[0].mxu0
    %v706 = vadd.f32 %v524, %v705
    %v707 = vpop.f32.mrb[0].mxu0
    %v708 = vadd.f32 %v528, %v707
    %v709 = vpop.f32.mrb[0].mxu0
    %v710 = vadd.f32 %v524, %v709
    %v711 = vpop.f32.mrb[0].mxu0
    %v712 = vadd.f32 %v528, %v711
    %713 = vmatprep.mubr.bf16.mxu0 0
    %714 = vmatmul.mubr.bf16.gmra.mrb[0].mxu0 %v494
    %v715 = vpop.f32.mrb[0].mxu0
    %v716 = vadd.f32 %v524, %v715
    %v717 = vpop.f32.mrb[0].mxu0
    %v718 = vadd.f32 %v528, %v717
    %v719 = vpop.f32.mrb[0].mxu0
    %v720 = vadd.f32 %v524, %v719
    %v721 = vpop.f32.mrb[0].mxu0
    %v722 = vadd.f32 %v528, %v721
    %723 = vmatprep.mubr.bf16.mxu0 0
    %724 = vmatmul.mubr.bf16.gmra.mrb[0].mxu0 %v495
    %v725 = vpop.f32.mrb[0].mxu0
    %v726 = vadd.f32 %v524, %v725
    %v727 = vpop.f32.mrb[0].mxu0
    %v728 = vadd.f32 %v528, %v727
    %v729 = vpop.f32.mrb[0].mxu0
    %v730 = vadd.f32 %v524, %v729
    %v731 = vpop.f32.mrb[0].mxu0
    %v732 = vadd.f32 %v528, %v731
    %733 = vmatprep.mubr.bf16.mxu0 0
    %734 = vmatmul.mubr.bf16.gmra.mrb[0].mxu0 %v496
    %v735 = vpop.f32.mrb[0].mxu0
    %v736 = vadd.f32 %v524, %v735
    %v737 = vpop.f32.mrb[0].mxu0
    %v738 = vadd.f32 %v528, %v737
    %v739 = vpop.f32.mrb[0].mxu0
    %v740 = vadd.f32 %v524, %v739
    %v741 = vpop.f32.mrb[0].mxu0
    %v742 = vadd.f32 %v528, %v741
    %743 = vmatprep.mubr.bf16.mxu0 0
    %744 = vmatmul.mubr.bf16.gmra.mrb[0].mxu0 %v497
    %v745 = vpop.f32.mrb[0].mxu0
    %v746 = vadd.f32 %v524, %v745
    %v747 = vpop.f32.mrb[0].mxu0
    %v748 = vadd.f32 %v528, %v747
    %v749 = vpop.f32.mrb[0].mxu0
    %v750 = vadd.f32 %v524, %v749
    %v751 = vpop.f32.mrb[0].mxu0
    %v752 = vadd.f32 %v528, %v751
    %753 = vmatprep.mubr.bf16.mxu0 0
    %754 = vmatmul.mubr.bf16.gmra.mrb[0].mxu0 %v498
    %v755 = vpop.f32.mrb[0].mxu0
    %v756 = vadd.f32 %v524, %v755
    %v757 = vpop.f32.mrb[0].mxu0
    %v758 = vadd.f32 %v528, %v757
    %v759 = vpop.f32.mrb[0].mxu0
    %v760 = vadd.f32 %v524, %v759
    %v761 = vpop.f32.mrb[0].mxu0
    %v762 = vadd.f32 %v528, %v761
    %763 = vmatprep.mubr.bf16.mxu0 0
    %764 = vmatmul.mubr.bf16.gmra.mrb[0].mxu0 %v499
    %v765 = vpop.f32.mrb[0].mxu0
    %v766 = vadd.f32 %v524, %v765
    %v767 = vpop.f32.mrb[0].mxu0
    %v768 = vadd.f32 %v528, %v767
    %v769 = vpop.f32.mrb[0].mxu0
    %v770 = vadd.f32 %v524, %v769
    %v771 = vpop.f32.mrb[0].mxu0
    %v772 = vadd.f32 %v528, %v771
    %773 = vmatprep.mubr.bf16.mxu0 0
    %774 = vmatmul.mubr.bf16.gmra.mrb[0].mxu0 %v500
    %v775 = vpop.f32.mrb[0].mxu0
    %v776 = vadd.f32 %v524, %v775
    %v777 = vpop.f32.mrb[0].mxu0
    %v778 = vadd.f32 %v528, %v777
    %v779 = vpop.f32.mrb[0].mxu0
    %v780 = vadd.f32 %v524, %v779
    %v781 = vpop.f32.mrb[0].mxu0
    %v782 = vadd.f32 %v528, %v781
    %783 = vmatprep.mubr.bf16.mxu0 0
    %784 = vmatmul.mubr.bf16.gmra.mrb[0].mxu0 %v501
    %v785 = vpop.f32.mrb[0].mxu0
    %v786 = vadd.f32 %v524, %v785
    %v787 = vpop.f32.mrb[0].mxu0
    %v788 = vadd.f32 %v528, %v787
    %v789 = vpop.f32.mrb[0].mxu0
    %v790 = vadd.f32 %v524, %v789
    %v791 = vpop.f32.mrb[0].mxu0
    %v792 = vadd.f32 %v528, %v791
    %793 = vmatprep.mubr.bf16.mxu0 0
    %794 = vmatmul.mubr.bf16.gmra.mrb[0].mxu0 %v502
    %v795 = vpop.f32.mrb[0].mxu0
    %v796 = vadd.f32 %v524, %v795
    %v797 = vpop.f32.mrb[0].mxu0
    %v798 = vadd.f32 %v528, %v797
    %v799 = vpop.f32.mrb[0].mxu0
    %v800 = vadd.f32 %v524, %v799
    %v801 = vpop.f32.mrb[0].mxu0
    %v802 = vadd.f32 %v528, %v801
    %803 = vdwg.mxu0
    %v804 = vmul.f32 %v646, 0.5
    %v805 = vmul.f32 %v648, 0.5
    %v806 = vmul.f32 %v650, 0.5
    %v807 = vmul.f32 %v652, 0.5
    %v808 = vmul.f32 %v656, 0.5
    %v809 = vmul.f32 %v658, 0.5
    %v810 = vmul.f32 %v660, 0.5
    %v811 = vmul.f32 %v662, 0.5
    %v812 = vmul.f32 %v666, 0.5
    %v813 = vmul.f32 %v668, 0.5
    %v814 = vmul.f32 %v670, 0.5
    %v815 = vmul.f32 %v672, 0.5
    %v816 = vmul.f32 %v676, 0.5
    %v817 = vmul.f32 %v678, 0.5
    %v818 = vmul.f32 %v680, 0.5
    %v819 = vmul.f32 %v682, 0.5
    %v820 = vmul.f32 %v686, 0.5
    %v821 = vmul.f32 %v688, 0.5
    %v822 = vmul.f32 %v690, 0.5
    %v823 = vmul.f32 %v692, 0.5
    %v824 = vmul.f32 %v696, 0.5
    %v825 = vmul.f32 %v698, 0.5
    %v826 = vmul.f32 %v700, 0.5
    %v827 = vmul.f32 %v702, 0.5
    %v828 = vmul.f32 %v706, 0.5
    %v829 = vmul.f32 %v708, 0.5
    %v830 = vmul.f32 %v710, 0.5
    %v831 = vmul.f32 %v712, 0.5
    %v832 = vmul.f32 %v716, 0.5
    %v833 = vmul.f32 %v718, 0.5
    %v834 = vmul.f32 %v720, 0.5
    %v835 = vmul.f32 %v722, 0.5
    %v836 = vmul.f32 %v726, 0.5
    %v837 = vmul.f32 %v728, 0.5
    %v838 = vmul.f32 %v730, 0.5
    %v839 = vmul.f32 %v732, 0.5
    %v840 = vmul.f32 %v736, 0.5
    %v841 = vmul.f32 %v738, 0.5
    %v842 = vmul.f32 %v740, 0.5
    %v843 = vmul.f32 %v742, 0.5
    %v844 = vmul.f32 %v746, 0.5
    %v845 = vmul.f32 %v748, 0.5
    %v846 = vmul.f32 %v750, 0.5
    %v847 = vmul.f32 %v752, 0.5
    %v848 = vmul.f32 %v756, 0.5
    %v849 = vmul.f32 %v758, 0.5
    %v850 = vmul.f32 %v760, 0.5
    %v851 = vmul.f32 %v762, 0.5
    %v852 = vmul.f32 %v766, 0.5
    %v853 = vmul.f32 %v768, 0.5
    %v854 = vmul.f32 %v770, 0.5
    %v855 = vmul.f32 %v772, 0.5
    %v856 = vmul.f32 %v776, 0.5
    %v857 = vmul.f32 %v778, 0.5
    %v858 = vmul.f32 %v780, 0.5
    %v859 = vmul.f32 %v782, 0.5
    %v860 = vmul.f32 %v786, 0.5
    %v861 = vmul.f32 %v788, 0.5
    %v862 = vmul.f32 %v790, 0.5
    %v863 = vmul.f32 %v792, 0.5
    %v864 = vmul.f32 %v796, 0.5
    %v865 = vmul.f32 %v798, 0.5
    %v866 = vmul.f32 %v800, 0.5
    %v867 = vmul.f32 %v802, 0.5
    %v868 = vtanh.pop %v804
    %v869 = vtanh.pop %v805
    %v870 = vtanh.pop %v806
    %v871 = vtanh.pop %v807
    %v872 = vtanh.pop %v808
    %v873 = vtanh.pop %v809
    %v874 = vtanh.pop %v810
    %v875 = vtanh.pop %v811
    %v876 = vtanh.pop %v812
    %v877 = vtanh.pop %v813
    %v878 = vtanh.pop %v814
    %v879 = vtanh.pop %v815
    %v880 = vtanh.pop %v816
    %v881 = vtanh.pop %v817
    %v882 = vtanh.pop %v818
    %v883 = vtanh.pop %v819
    %v884 = vtanh.pop %v820
    %v885 = vtanh.pop %v821
    %v886 = vtanh.pop %v822
    %v887 = vtanh.pop %v823
    %v888 = vtanh.pop %v824
    %v889 = vtanh.pop %v825
    %v890 = vtanh.pop %v826
    %v891 = vtanh.pop %v827
    %v892 = vtanh.pop %v828
    %v893 = vtanh.pop %v829
    %v894 = vtanh.pop %v830
    %v895 = vtanh.pop %v831
    %v896 = vtanh.pop %v832
    %v897 = vtanh.pop %v833
    %v898 = vtanh.pop %v834
    %v899 = vtanh.pop %v835
    %v900 = vtanh.pop %v836
    %v901 = vtanh.pop %v837
    %v902 = vtanh.pop %v838
    %v903 = vtanh.pop %v839
    %v904 = vtanh.pop %v840
    %v905 = vtanh.pop %v841
    %v906 = vtanh.pop %v842
    %v907 = vtanh.pop %v843
    %v908 = vtanh.pop %v844
    %v909 = vtanh.pop %v845
    %v910 = vtanh.pop %v846
    %v911 = vtanh.pop %v847
    %v912 = vtanh.pop %v848
    %v913 = vtanh.pop %v849
    %v914 = vtanh.pop %v850
    %v915 = vtanh.pop %v851
    %v916 = vtanh.pop %v852
    %v917 = vtanh.pop %v853
    %v918 = vtanh.pop %v854
    %v919 = vtanh.pop %v855
    %v920 = vtanh.pop %v856
    %v921 = vtanh.pop %v857
    %v922 = vtanh.pop %v858
    %v923 = vtanh.pop %v859
    %v924 = vtanh.pop %v860
    %v925 = vtanh.pop %v861
    %v926 = vtanh.pop %v862
    %v927 = vtanh.pop %v863
    %v928 = vtanh.pop %v864
    %v929 = vtanh.pop %v865
    %v930 = vtanh.pop %v866
    %v931 = vtanh.pop %v867
    %v932 = vadd.f32 %v868, 1.0
    %v933 = vadd.f32 %v869, 1.0
    %v934 = vadd.f32 %v870, 1.0
    %v935 = vadd.f32 %v871, 1.0
    %v936 = vadd.f32 %v872, 1.0
    %v937 = vadd.f32 %v873, 1.0
    %v938 = vadd.f32 %v874, 1.0
    %v939 = vadd.f32 %v875, 1.0
    %v940 = vadd.f32 %v876, 1.0
    %v941 = vadd.f32 %v877, 1.0
    %v942 = vadd.f32 %v878, 1.0
    %v943 = vadd.f32 %v879, 1.0
    %v944 = vadd.f32 %v880, 1.0
    %v945 = vadd.f32 %v881, 1.0
    %v946 = vadd.f32 %v882, 1.0
    %v947 = vadd.f32 %v883, 1.0
    %v948 = vadd.f32 %v884, 1.0
    %v949 = vadd.f32 %v885, 1.0
    %v950 = vadd.f32 %v886, 1.0
    %v951 = vadd.f32 %v887, 1.0
    %v952 = vadd.f32 %v888, 1.0
    %v953 = vadd.f32 %v889, 1.0
    %v954 = vadd.f32 %v890, 1.0
    %v955 = vadd.f32 %v891, 1.0
    %v956 = vadd.f32 %v892, 1.0
    %v957 = vadd.f32 %v893, 1.0
    %v958 = vadd.f32 %v894, 1.0
    %v959 = vadd.f32 %v895, 1.0
    %v960 = vadd.f32 %v896, 1.0
    %v961 = vadd.f32 %v897, 1.0
    %v962 = vadd.f32 %v898, 1.0
    %v963 = vadd.f32 %v899, 1.0
    %v964 = vadd.f32 %v900, 1.0
    %v965 = vadd.f32 %v901, 1.0
    %v966 = vadd.f32 %v902, 1.0
    %v967 = vadd.f32 %v903, 1.0
    %v968 = vadd.f32 %v904, 1.0
    %v969 = vadd.f32 %v905, 1.0
    %v970 = vadd.f32 %v906, 1.0
    %v971 = vadd.f32 %v907, 1.0
    %v972 = vadd.f32 %v908, 1.0
    %v973 = vadd.f32 %v909, 1.0
    %v974 = vadd.f32 %v910, 1.0
    %v975 = vadd.f32 %v911, 1.0
    %v976 = vadd.f32 %v912, 1.0
    %v977 = vadd.f32 %v913, 1.0
    %v978 = vadd.f32 %v914, 1.0
    %v979 = vadd.f32 %v915, 1.0
    %v980 = vadd.f32 %v916, 1.0
    %v981 = vadd.f32 %v917, 1.0
    %v982 = vadd.f32 %v918, 1.0
    %v983 = vadd.f32 %v919, 1.0
    %v984 = vadd.f32 %v920, 1.0
    %v985 = vadd.f32 %v921, 1.0
    %v986 = vadd.f32 %v922, 1.0
    %v987 = vadd.f32 %v923, 1.0
    %v988 = vadd.f32 %v924, 1.0
    %v989 = vadd.f32 %v925, 1.0
    %v990 = vadd.f32 %v926, 1.0
    %v991 = vadd.f32 %v927, 1.0
    %v992 = vadd.f32 %v928, 1.0
    %v993 = vadd.f32 %v929, 1.0
    %v994 = vadd.f32 %v930, 1.0
    %v995 = vadd.f32 %v931, 1.0
    %v996 = vmul.f32 %v932, 0.5
    %v997 = vmul.f32 %v933, 0.5
    %v998 = vmul.f32 %v934, 0.5
    %v999 = vmul.f32 %v935, 0.5
    %v1000 = vmul.f32 %v936, 0.5
    %v1001 = vmul.f32 %v937, 0.5
    %v1002 = vmul.f32 %v938, 0.5
    %v1003 = vmul.f32 %v939, 0.5
    %v1004 = vmul.f32 %v940, 0.5
    %v1005 = vmul.f32 %v941, 0.5
    %v1006 = vmul.f32 %v942, 0.5
    %v1007 = vmul.f32 %v943, 0.5
    %v1008 = vmul.f32 %v944, 0.5
    %v1009 = vmul.f32 %v945, 0.5
    %v1010 = vmul.f32 %v946, 0.5
    %v1011 = vmul.f32 %v947, 0.5
    %v1012 = vmul.f32 %v948, 0.5
    %v1013 = vmul.f32 %v949, 0.5
    %v1014 = vmul.f32 %v950, 0.5
    %v1015 = vmul.f32 %v951, 0.5
    %v1016 = vmul.f32 %v952, 0.5
    %v1017 = vmul.f32 %v953, 0.5
    %v1018 = vmul.f32 %v954, 0.5
    %v1019 = vmul.f32 %v955, 0.5
    %v1020 = vmul.f32 %v956, 0.5
    %v1021 = vmul.f32 %v957, 0.5
    %v1022 = vmul.f32 %v958, 0.5
    %v1023 = vmul.f32 %v959, 0.5
    %v1024 = vmul.f32 %v960, 0.5
    %v1025 = vmul.f32 %v961, 0.5
    %v1026 = vmul.f32 %v962, 0.5
    %v1027 = vmul.f32 %v963, 0.5
    %v1028 = vmul.f32 %v964, 0.5
    %v1029 = vmul.f32 %v965, 0.5
    %v1030 = vmul.f32 %v966, 0.5
    %v1031 = vmul.f32 %v967, 0.5
    %v1032 = vmul.f32 %v968, 0.5
    %v1033 = vmul.f32 %v969, 0.5
    %v1034 = vmul.f32 %v970, 0.5
    %v1035 = vmul.f32 %v971, 0.5
    %v1036 = vmul.f32 %v972, 0.5
    %v1037 = vmul.f32 %v973, 0.5
    %v1038 = vmul.f32 %v974, 0.5
    %v1039 = vmul.f32 %v975, 0.5
    %v1040 = vmul.f32 %v976, 0.5
    %v1041 = vmul.f32 %v977, 0.5
    %v1042 = vmul.f32 %v978, 0.5
    %v1043 = vmul.f32 %v979, 0.5
    %v1044 = vmul.f32 %v980, 0.5
    %v1045 = vmul.f32 %v981, 0.5
    %v1046 = vmul.f32 %v982, 0.5
    %v1047 = vmul.f32 %v983, 0.5
    %v1048 = vmul.f32 %v984, 0.5
    %v1049 = vmul.f32 %v985, 0.5
    %v1050 = vmul.f32 %v986, 0.5
    %v1051 = vmul.f32 %v987, 0.5
    %v1052 = vmul.f32 %v988, 0.5
    %v1053 = vmul.f32 %v989, 0.5
    %v1054 = vmul.f32 %v990, 0.5
    %v1055 = vmul.f32 %v991, 0.5
    %v1056 = vmul.f32 %v992, 0.5
    %v1057 = vmul.f32 %v993, 0.5
    %v1058 = vmul.f32 %v994, 0.5
    %v1059 = vmul.f32 %v995, 0.5
    %1060 = vst [vmem:[#allocation8] sm:$0xff] %v996
    %1061 = vst [vmem:[#allocation8 + $0x8] sm:$0xff] %v997
    %1062 = vst [vmem:[#allocation8 + $0x10] sm:$0xff] %v998
    %1063 = vst [vmem:[#allocation8 + $0x18] sm:$0xff] %v999
    %1064 = vst [vmem:[#allocation8 + $0x20] sm:$0xff] %v1000
    %1065 = vst [vmem:[#allocation8 + $0x28] sm:$0xff] %v1001
    %1066 = vst [vmem:[#allocation8 + $0x30] sm:$0xff] %v1002
    %1067 = vst [vmem:[#allocation8 + $0x38] sm:$0xff] %v1003
    %1068 = vst [vmem:[#allocation8 + $0x40] sm:$0xff] %v1004
    %1069 = vst [vmem:[#allocation8 + $0x48] sm:$0xff] %v1005
    %1070 = vst [vmem:[#allocation8 + $0x50] sm:$0xff] %v1006
    %1071 = vst [vmem:[#allocation8 + $0x58] sm:$0xff] %v1007
    %1072 = vst [vmem:[#allocation8 + $0x60] sm:$0xff] %v1008
    %1073 = vst [vmem:[#allocation8 + $0x68] sm:$0xff] %v1009
    %1074 = vst [vmem:[#allocation8 + $0x70] sm:$0xff] %v1010
    %1075 = vst [vmem:[#allocation8 + $0x78] sm:$0xff] %v1011
    %1076 = vst [vmem:[#allocation8 + $0x80] sm:$0xff] %v1012
    %1077 = vst [vmem:[#allocation8 + $0x88] sm:$0xff] %v1013
    %1078 = vst [vmem:[#allocation8 + $0x90] sm:$0xff] %v1014
    %1079 = vst [vmem:[#allocation8 + $0x98] sm:$0xff] %v1015
    %1080 = vst [vmem:[#allocation8 + $0xa0] sm:$0xff] %v1016
    %1081 = vst [vmem:[#allocation8 + $0xa8] sm:$0xff] %v1017
    %1082 = vst [vmem:[#allocation8 + $0xb0] sm:$0xff] %v1018
    %1083 = vst [vmem:[#allocation8 + $0xb8] sm:$0xff] %v1019
    %1084 = vst [vmem:[#allocation8 + $0xc0] sm:$0xff] %v1020
    %1085 = vst [vmem:[#allocation8 + $0xc8] sm:$0xff] %v1021
    %1086 = vst [vmem:[#allocation8 + $0xd0] sm:$0xff] %v1022
    %1087 = vst [vmem:[#allocation8 + $0xd8] sm:$0xff] %v1023
    %1088 = vst [vmem:[#allocation8 + $0xe0] sm:$0xff] %v1024
    %1089 = vst [vmem:[#allocation8 + $0xe8] sm:$0xff] %v1025
    %1090 = vst [vmem:[#allocation8 + $0xf0] sm:$0xff] %v1026
    %1091 = vst [vmem:[#allocation8 + $0xf8] sm:$0xff] %v1027
    %1092 = vst [vmem:[#allocation8 + $0x100] sm:$0xff] %v1028
    %1093 = vst [vmem:[#allocation8 + $0x108] sm:$0xff] %v1029
    %1094 = vst [vmem:[#allocation8 + $0x110] sm:$0xff] %v1030
    %1095 = vst [vmem:[#allocation8 + $0x118] sm:$0xff] %v1031
    %1096 = vst [vmem:[#allocation8 + $0x120] sm:$0xff] %v1032
    %1097 = vst [vmem:[#allocation8 + $0x128] sm:$0xff] %v1033
    %1098 = vst [vmem:[#allocation8 + $0x130] sm:$0xff] %v1034
    %1099 = vst [vmem:[#allocation8 + $0x138] sm:$0xff] %v1035
    %1100 = vst [vmem:[#allocation8 + $0x140] sm:$0xff] %v1036
    %1101 = vst [vmem:[#allocation8 + $0x148] sm:$0xff] %v1037
    %1102 = vst [vmem:[#allocation8 + $0x150] sm:$0xff] %v1038
    %1103 = vst [vmem:[#allocation8 + $0x158] sm:$0xff] %v1039
    %1104 = vst [vmem:[#allocation8 + $0x160] sm:$0xff] %v1040
    %1105 = vst [vmem:[#allocation8 + $0x168] sm:$0xff] %v1041
    %1106 = vst [vmem:[#allocation8 + $0x170] sm:$0xff] %v1042
    %1107 = vst [vmem:[#allocation8 + $0x178] sm:$0xff] %v1043
    %1108 = vst [vmem:[#allocation8 + $0x180] sm:$0xff] %v1044
    %1109 = vst [vmem:[#allocation8 + $0x188] sm:$0xff] %v1045
    %1110 = vst [vmem:[#allocation8 + $0x190] sm:$0xff] %v1046
    %1111 = vst [vmem:[#allocation8 + $0x198] sm:$0xff] %v1047
    %1112 = vst [vmem:[#allocation8 + $0x1a0] sm:$0xff] %v1048
    %1113 = vst [vmem:[#allocation8 + $0x1a8] sm:$0xff] %v1049
    %1114 = vst [vmem:[#allocation8 + $0x1b0] sm:$0xff] %v1050
    %1115 = vst [vmem:[#allocation8 + $0x1b8] sm:$0xff] %v1051
    %1116 = vst [vmem:[#allocation8 + $0x1c0] sm:$0xff] %v1052
    %1117 = vst [vmem:[#allocation8 + $0x1c8] sm:$0xff] %v1053
    %1118 = vst [vmem:[#allocation8 + $0x1d0] sm:$0xff] %v1054
    %1119 = vst [vmem:[#allocation8 + $0x1d8] sm:$0xff] %v1055
    %1120 = vst [vmem:[#allocation8 + $0x1e0] sm:$0xff] %v1056
    %1121 = vst [vmem:[#allocation8 + $0x1e8] sm:$0xff] %v1057
    %1122 = vst [vmem:[#allocation8 + $0x1f0] sm:$0xff] %v1058
    %1123 = vst [vmem:[#allocation8 + $0x1f8] sm:$0xff] %v1059
    // Predicated region
    $region34: #{tpu_custom_call.1} parent=1 // pred_check
      _
    $region35: #{tpu_custom_call.1} parent=1 // pred_check_branch
      %1125 = sbr.rel (0) target = $region37
    $region36: #{tpu_custom_call.1} parent=1 // pred_region
      %s1127 = ssub.s32 8192, 8192
      %1128 = vsyncadd [#allocation4], %s1127
      %s1129 = sshll.u32 [#allocation8], 4
      %s1130 = int_to_ptr.vmem [resolvable:$true] %s1129
      %1135 = dma.vmem_to_hbm [thread:$0]  %s1130, 8192, %s5, [#allocation4], 256, 256, 16
    $region37: #{tpu_custom_call.1} parent=1 // pred_fallthru
      _
    // Predicated region
    $region38: #{tpu_custom_call.1} parent=1 // pred_check
      _
    $region39: #{tpu_custom_call.1} parent=1 // pred_check_branch
      %1137 = sbr.rel (0) target = $region41
    $region40: #{tpu_custom_call.1} parent=1 // pred_region
      %1138 = dma.done [#allocation4], 8192
    $region41: #{tpu_custom_call.1} parent=1 // pred_fallthru
      _
    %1139 = vsyncpa [#allocation3], 1
    %1140 = vsyncpa [#allocation6], 1
    %1141 = vsyncpa [#allocation4], 1

</llo_original>
